<compile_context>
chip_gen: v6e
topology: v6e:2x2x1
jax: 0.10.0
libtpu: 0.0.40
codegen_flags: <defaults>
</compile_context>

<pallas_src>
import numpy as np
import jax
import jax.numpy as jnp
from jax import lax
from jax.experimental import pallas as pl
from jax.experimental.pallas import tpu as pltpu

LANE = 128  # TPU lane width (last-dim vreg extent)


def _round_up(v, m):
    return ((v + m - 1) // m) * m


def _make_kernel(n_neurons, n_pos, rc, n_chunks, compute_dtype):
    """Build the kernel body with all tiling decisions baked in statically.

    n_pos: static split point (neurons [0, n_pos) have w2 >= 0, the rest
           w2 < 0) or None to use the sign-multiply fallback.
    rc:    rows per register-resident chunk.
    n_chunks: tb // rc (static).
    """
    neuron_unroll = n_neurons if n_neurons <= 32 else 8

    def kernel(a_ref, c_ref, s_ref, b2_ref, x_ref, out_ref):
        # a/c/s: (N,) f32 in SMEM, b2: (1,) f32 in SMEM.
        # x_ref/out_ref: (tb, 128) f32 lane-dense batch tile in VMEM.

        def do_chunk(r0):
            # Load one small row chunk once; it stays in vregs for the whole
            # neuron loop (register blocking).
            xc = x_ref[pl.ds(r0, rc), :].astype(compute_dtype)     # (rc, 128)
            acc = jnp.full((rc, LANE), b2_ref[0], dtype=compute_dtype)

            def plus(i, acc):   # w2_i >= 0:  += relu(a_i*x + c_i)
                u = xc * a_ref[i].astype(compute_dtype) \
                    + c_ref[i].astype(compute_dtype)
                return acc + jnp.maximum(u, 0.0)

            def minus(i, acc):  # w2_i < 0:   -= relu(a_i*x + c_i)
                u = xc * a_ref[i].astype(compute_dtype) \
                    + c_ref[i].astype(compute_dtype)
                return acc - jnp.maximum(u, 0.0)

            def signed(i, acc):  # fallback (traced weights): + s_i*relu(...)
                u = xc * a_ref[i].astype(compute_dtype) \
                    + c_ref[i].astype(compute_dtype)
                return acc + s_ref[i].astype(compute_dtype) * jnp.maximum(u, 0.0)

            if n_pos is None:
                acc = lax.fori_loop(0, n_neurons, signed, acc,
                                    unroll=neuron_unroll)
            else:
                if n_pos > 0:
                    acc = lax.fori_loop(0, n_pos, plus, acc,
                                        unroll=min(n_pos, neuron_unroll))
                if n_pos < n_neurons:
                    acc = lax.fori_loop(n_pos, n_neurons, minus, acc,
                                        unroll=min(n_neurons - n_pos,
                                                   neuron_unroll))

            # One store per chunk (instead of one per neuron iteration).
            out_ref[pl.ds(r0, rc), :] = acc.astype(out_ref.dtype)

        if n_chunks == 1:
            do_chunk(0)
        else:
            def chunk_body(j, carry):
                do_chunk(pl.multiple_of(j * rc, rc))
                return carry
            lax.fori_loop(0, n_chunks, chunk_body, 0)

    return kernel


def approximator_forward(x, w1, b1, w2, b2, *, tile_rows=1024,
                         compute_dtype=jnp.float32):
    """Forward pass of Approximator (ANN / non-spike mode).

    x:  (B, 1) float32
    w1: (N, 1), b1: (N,)     -- fc1 = Linear(1, N)
    w2: (1, N), b2: (1,)     -- fc2 = Linear(N, 1)
    returns (B, 1) float32

    Note: the zero-copy fast path requires B to be a multiple of 128; other
    batch sizes pay one pad pass over x and one slice over the output.
    compute_dtype=jnp.bfloat16 enables the faster v6e/v7x VPU path (changes
    numerics to ~1e-2 relative); default f32 is exact and v5e-friendly.
    """
    B = x.shape[0]
    n = w1.shape[0]

    # ---- host-side weight prep: fold fc2 weight into fc1 coefficients ------
    w1f = w1.reshape(n).astype(jnp.float32)
    b1f = b1.reshape(n).astype(jnp.float32)
    w2f = w2.reshape(n).astype(jnp.float32)
    b2f = b2.reshape(1).astype(jnp.float32)

    a = jnp.abs(w2f) * w1f          # a_n = |w2_n| * w1_n
    c = jnp.abs(w2f) * b1f          # c_n = |w2_n| * b1_n
    sgn = jnp.sign(w2f)             # only used by the traced-weights fallback

    n_pos = None
    try:
        # Static sign split (needs concrete weights, e.g. eager / inference).
        w2_np = np.asarray(jax.device_get(w2f))
        pos = np.nonzero(w2_np >= 0)[0]
        neg = np.nonzero(w2_np < 0)[0]
        perm = jnp.asarray(np.concatenate([pos, neg]).astype(np.int32))
        a, c = a[perm], c[perm]
        n_pos = int(pos.size)
    except Exception:
        n_pos = None                # weights are tracers: sign-multiply path

    # ---- lane-dense batch layout: (B,1) -> (rows, 128) ----------------------
    xf = x.reshape(-1)
    if xf.dtype != jnp.float32:
        xf = xf.astype(jnp.float32)
    rows = pl.cdiv(B, LANE)
    pad = rows * LANE - B
    if pad:
        xf = jnp.pad(xf, (0, pad))  # only when B is not a multiple of 128
    x2d = xf.reshape(rows, LANE)

    # ---- tile sizing: grid-length floor for dual-TC / pipelining ------------
    if rows <= 8:
        tb = rows                   # single full-extent block (tiny batch)
    else:
        tb = max(8, min(tile_rows, _round_up(pl.cdiv(rows, 4), 8)))
    if tb % 32 == 0:
        rc = 32
    elif tb % 16 == 0:
        rc = 16
    elif tb % 8 == 0:
        rc = 8
    else:
        rc = tb                     # rows <= 8 case
    n_chunks = tb // rc
    grid = (pl.cdiv(rows, tb),)     # ragged last tile handled by edge masking

    smem = pl.BlockSpec(memory_space=pltpu.MemorySpace.SMEM)
    out2d = pl.pallas_call(
        _make_kernel(n, n_pos, rc, n_chunks, compute_dtype),
        out_shape=jax.ShapeDtypeStruct((rows, LANE), jnp.float32),
        grid=grid,
        in_specs=[
            smem,                                           # a  (N,)
            smem,                                           # c  (N,)
            smem,                                           # sgn(N,)
            smem,                                           # b2 (1,)
            pl.BlockSpec((tb, LANE), lambda i: (i, 0)),     # x tile
        ],
        out_specs=pl.BlockSpec((tb, LANE), lambda i: (i, 0)),
        compiler_params=pltpu.CompilerParams(
            dimension_semantics=("parallel",),              # split batch on v7x
        ),
    )(a, c, sgn, b2f, x2d)

    out = out2d.reshape(-1)
    if pad:
        out = out[:B]
    return out.reshape(B, 1)


def _torch_linear_init(key, out_features, in_features):
    """Deterministic init matching nn.Linear's default U(-1/sqrt(fan_in), +)."""
    kw, kb = jax.random.split(key)
    bound = 1.0 / jnp.sqrt(jnp.float32(in_features))
    w = jax.random.uniform(kw, (out_features, in_features),
                           minval=-bound, maxval=bound, dtype=jnp.float32)
    b = jax.random.uniform(kb, (out_features,),
                           minval=-bound, maxval=bound, dtype=jnp.float32)
    return w, b


def _reference(x, w1, b1, w2, b2):
    return jnp.maximum(x @ w1.T + b1, 0.0) @ w2.T + b2


if __name__ == "__main__":
    n_neurons = 32
    batch = 8

    key = jax.random.PRNGKey(0)
    k_x, k_fc1, k_fc2 = jax.random.split(key, 3)

    # Parameters (shapes per Approximator.__init__)
    w1, b1 = _torch_linear_init(k_fc1, n_neurons, 1)   # fc1: Linear(1, n_neurons)
    w2, b2 = _torch_linear_init(k_fc2, 1, n_neurons)   # fc2: Linear(n_neurons, 1)

    # Small example input: (B, 1) as implied by fc1 in_features == 1
    x = jax.random.normal(k_x, (batch, 1), dtype=jnp.float32)
    out = jax.block_until_ready(approximator_forward(x, w1, b1, w2, b2))
    ref = _reference(x, w1, b1, w2, b2)
    assert out.shape == (batch, 1)
    assert jnp.allclose(out, ref, atol=1e-5, rtol=1e-5)

    # B not a multiple of 128: exercises the documented pad + slice path.
    x2 = jax.random.normal(jax.random.PRNGKey(1), (300, 1), dtype=jnp.float32)
    out2 = jax.block_until_ready(approximator_forward(x2, w1, b1, w2, b2))
    assert out2.shape == (300, 1)
    assert jnp.allclose(out2, _reference(x2, w1, b1, w2, b2),
                        atol=1e-5, rtol=1e-5)

    # Multi-step grid with a ragged last tile (rows=37, tb=16): exercises the
    # cdiv grid + Pallas edge masking with zero wrapper pad/slice.
    x3 = jax.random.normal(jax.random.PRNGKey(2), (37 * 128, 1), jnp.float32)
    out3 = jax.block_until_ready(approximator_forward(x3, w1, b1, w2, b2))
    assert jnp.allclose(out3, _reference(x3, w1, b1, w2, b2),
                        atol=1e-4, rtol=1e-4)

    # Larger batch: exercises the in-kernel register-blocked chunk loop
    # (rows=256 -> tb=64, rc=32, 2 chunks/tile, grid=(4,)).
    x4 = jax.random.normal(jax.random.PRNGKey(3), (256 * 128, 1), jnp.float32)
    out4 = jax.block_until_ready(approximator_forward(x4, w1, b1, w2, b2))
    assert jnp.allclose(out4, _reference(x4, w1, b1, w2, b2),
                        atol=1e-4, rtol=1e-4)

    # Optional bf16 compute path (v6e/v7x VPU win). Best-effort: the default
    # f32 path above is the reference; bf16 is numerics-changing and only
    # checked loosely, and any failure here is non-fatal.
    try:
        out_bf = jax.block_until_ready(
            approximator_forward(x4, w1, b1, w2, b2,
                                 compute_dtype=jnp.bfloat16))
        assert out_bf.shape == out4.shape
        assert float(jnp.max(jnp.abs(out_bf - out4))) < 0.25
    except Exception:
        pass  # TODO(synk): bf16 path is opportunistic; f32 remains canonical.

    print("KERNEL_OK")
</pallas_src>

<mosaic_0001>
module attributes {stable_mosaic.version = 11 : i64} {
  func.func @kernel(%arg0: i32, %arg1: memref<32xf32, #tpu.memory_space<smem>>, %arg2: memref<32xf32, #tpu.memory_space<smem>>, %arg3: memref<32xf32, #tpu.memory_space<smem>>, %arg4: memref<1xf32, #tpu.memory_space<smem>>, %arg5: memref<1x128xf32, #tpu.memory_space<vmem>>, %arg6: memref<1x128xf32, #tpu.memory_space<vmem>>) attributes {dimension_semantics = [#tpu.dimension_semantics<parallel>], iteration_bounds = array<i64: 1>, scalar_prefetch = 0 : i64, scratch_operands = 0 : i64, tpu.core_type = #tpu.core_type<tc>, window_params = [{transform_indices = @transform_0, window_bounds = array<i64: 32>}, {transform_indices = @transform_1, window_bounds = array<i64: 32>}, {transform_indices = @transform_2, window_bounds = array<i64: 32>}, {transform_indices = @transform_3, window_bounds = array<i64: 1>}, {transform_indices = @transform_4, window_bounds = array<i64: 1, 128>}, {transform_indices = @transform_5, window_bounds = array<i64: 1, 128>}]} {
    %c0 = arith.constant 0 : index
    %c0_0 = arith.constant 0 : index
    %0 = vector.load %arg5[%c0, %c0_0] : memref<1x128xf32, #tpu.memory_space<vmem>>, vector<1x128xf32>
    %c0_1 = arith.constant 0 : index
    %1 = memref.load %arg4[%c0_1] : memref<1xf32, #tpu.memory_space<smem>>
    %2 = vector.broadcast %1 : f32 to vector<1x128xf32>
    %c0_i32 = arith.constant 0 : i32
    %3 = arith.index_cast %c0_i32 : i32 to index
    %4 = memref.load %arg1[%3] : memref<32xf32, #tpu.memory_space<smem>>
    %5 = vector.broadcast %4 : f32 to vector<1x128xf32>
    %6 = arith.mulf %0, %5 : vector<1x128xf32>
    %7 = arith.index_cast %c0_i32 : i32 to index
    %8 = memref.load %arg2[%7] : memref<32xf32, #tpu.memory_space<smem>>
    %9 = vector.broadcast %8 : f32 to vector<1x128xf32>
    %10 = arith.addf %6, %9 : vector<1x128xf32>
    %cst = arith.constant 0.000000e+00 : f32
    %11 = vector.broadcast %cst : f32 to vector<1x128xf32>
    %12 = arith.maximumf %10, %11 : vector<1x128xf32>
    %13 = arith.addf %2, %12 : vector<1x128xf32>
    %c1_i32 = arith.constant 1 : i32
    %14 = arith.index_cast %c1_i32 : i32 to index
    %15 = memref.load %arg1[%14] : memref<32xf32, #tpu.memory_space<smem>>
    %16 = vector.broadcast %15 : f32 to vector<1x128xf32>
    %17 = arith.mulf %0, %16 : vector<1x128xf32>
    %18 = arith.index_cast %c1_i32 : i32 to index
    %19 = memref.load %arg2[%18] : memref<32xf32, #tpu.memory_space<smem>>
    %20 = vector.broadcast %19 : f32 to vector<1x128xf32>
    %21 = arith.addf %17, %20 : vector<1x128xf32>
    %cst_2 = arith.constant 0.000000e+00 : f32
    %22 = vector.broadcast %cst_2 : f32 to vector<1x128xf32>
    %23 = arith.maximumf %21, %22 : vector<1x128xf32>
    %24 = arith.addf %13, %23 : vector<1x128xf32>
    %c2_i32 = arith.constant 2 : i32
    %25 = arith.index_cast %c2_i32 : i32 to index
    %26 = memref.load %arg1[%25] : memref<32xf32, #tpu.memory_space<smem>>
    %27 = vector.broadcast %26 : f32 to vector<1x128xf32>
    %28 = arith.mulf %0, %27 : vector<1x128xf32>
    %29 = arith.index_cast %c2_i32 : i32 to index
    %30 = memref.load %arg2[%29] : memref<32xf32, #tpu.memory_space<smem>>
    %31 = vector.broadcast %30 : f32 to vector<1x128xf32>
    %32 = arith.addf %28, %31 : vector<1x128xf32>
    %cst_3 = arith.constant 0.000000e+00 : f32
    %33 = vector.broadcast %cst_3 : f32 to vector<1x128xf32>
    %34 = arith.maximumf %32, %33 : vector<1x128xf32>
    %35 = arith.addf %24, %34 : vector<1x128xf32>
    %c3_i32 = arith.constant 3 : i32
    %36 = arith.index_cast %c3_i32 : i32 to index
    %37 = memref.load %arg1[%36] : memref<32xf32, #tpu.memory_space<smem>>
    %38 = vector.broadcast %37 : f32 to vector<1x128xf32>
    %39 = arith.mulf %0, %38 : vector<1x128xf32>
    %40 = arith.index_cast %c3_i32 : i32 to index
    %41 = memref.load %arg2[%40] : memref<32xf32, #tpu.memory_space<smem>>
    %42 = vector.broadcast %41 : f32 to vector<1x128xf32>
    %43 = arith.addf %39, %42 : vector<1x128xf32>
    %cst_4 = arith.constant 0.000000e+00 : f32
    %44 = vector.broadcast %cst_4 : f32 to vector<1x128xf32>
    %45 = arith.maximumf %43, %44 : vector<1x128xf32>
    %46 = arith.addf %35, %45 : vector<1x128xf32>
    %c4_i32 = arith.constant 4 : i32
    %47 = arith.index_cast %c4_i32 : i32 to index
    %48 = memref.load %arg1[%47] : memref<32xf32, #tpu.memory_space<smem>>
    %49 = vector.broadcast %48 : f32 to vector<1x128xf32>
    %50 = arith.mulf %0, %49 : vector<1x128xf32>
    %51 = arith.index_cast %c4_i32 : i32 to index
    %52 = memref.load %arg2[%51] : memref<32xf32, #tpu.memory_space<smem>>
    %53 = vector.broadcast %52 : f32 to vector<1x128xf32>
    %54 = arith.addf %50, %53 : vector<1x128xf32>
    %cst_5 = arith.constant 0.000000e+00 : f32
    %55 = vector.broadcast %cst_5 : f32 to vector<1x128xf32>
    %56 = arith.maximumf %54, %55 : vector<1x128xf32>
    %57 = arith.addf %46, %56 : vector<1x128xf32>
    %c5_i32 = arith.constant 5 : i32
    %58 = arith.index_cast %c5_i32 : i32 to index
    %59 = memref.load %arg1[%58] : memref<32xf32, #tpu.memory_space<smem>>
    %60 = vector.broadcast %59 : f32 to vector<1x128xf32>
    %61 = arith.mulf %0, %60 : vector<1x128xf32>
    %62 = arith.index_cast %c5_i32 : i32 to index
    %63 = memref.load %arg2[%62] : memref<32xf32, #tpu.memory_space<smem>>
    %64 = vector.broadcast %63 : f32 to vector<1x128xf32>
    %65 = arith.addf %61, %64 : vector<1x128xf32>
    %cst_6 = arith.constant 0.000000e+00 : f32
    %66 = vector.broadcast %cst_6 : f32 to vector<1x128xf32>
    %67 = arith.maximumf %65, %66 : vector<1x128xf32>
    %68 = arith.addf %57, %67 : vector<1x128xf32>
    %c6_i32 = arith.constant 6 : i32
    %69 = arith.index_cast %c6_i32 : i32 to index
    %70 = memref.load %arg1[%69] : memref<32xf32, #tpu.memory_space<smem>>
    %71 = vector.broadcast %70 : f32 to vector<1x128xf32>
    %72 = arith.mulf %0, %71 : vector<1x128xf32>
    %73 = arith.index_cast %c6_i32 : i32 to index
    %74 = memref.load %arg2[%73] : memref<32xf32, #tpu.memory_space<smem>>
    %75 = vector.broadcast %74 : f32 to vector<1x128xf32>
    %76 = arith.addf %72, %75 : vector<1x128xf32>
    %cst_7 = arith.constant 0.000000e+00 : f32
    %77 = vector.broadcast %cst_7 : f32 to vector<1x128xf32>
    %78 = arith.maximumf %76, %77 : vector<1x128xf32>
    %79 = arith.addf %68, %78 : vector<1x128xf32>
    %c7_i32 = arith.constant 7 : i32
    %80 = arith.index_cast %c7_i32 : i32 to index
    %81 = memref.load %arg1[%80] : memref<32xf32, #tpu.memory_space<smem>>
    %82 = vector.broadcast %81 : f32 to vector<1x128xf32>
    %83 = arith.mulf %0, %82 : vector<1x128xf32>
    %84 = arith.index_cast %c7_i32 : i32 to index
    %85 = memref.load %arg2[%84] : memref<32xf32, #tpu.memory_space<smem>>
    %86 = vector.broadcast %85 : f32 to vector<1x128xf32>
    %87 = arith.addf %83, %86 : vector<1x128xf32>
    %cst_8 = arith.constant 0.000000e+00 : f32
    %88 = vector.broadcast %cst_8 : f32 to vector<1x128xf32>
    %89 = arith.maximumf %87, %88 : vector<1x128xf32>
    %90 = arith.addf %79, %89 : vector<1x128xf32>
    %c8_i32 = arith.constant 8 : i32
    %91 = arith.index_cast %c8_i32 : i32 to index
    %92 = memref.load %arg1[%91] : memref<32xf32, #tpu.memory_space<smem>>
    %93 = vector.broadcast %92 : f32 to vector<1x128xf32>
    %94 = arith.mulf %0, %93 : vector<1x128xf32>
    %95 = arith.index_cast %c8_i32 : i32 to index
    %96 = memref.load %arg2[%95] : memref<32xf32, #tpu.memory_space<smem>>
    %97 = vector.broadcast %96 : f32 to vector<1x128xf32>
    %98 = arith.addf %94, %97 : vector<1x128xf32>
    %cst_9 = arith.constant 0.000000e+00 : f32
    %99 = vector.broadcast %cst_9 : f32 to vector<1x128xf32>
    %100 = arith.maximumf %98, %99 : vector<1x128xf32>
    %101 = arith.addf %90, %100 : vector<1x128xf32>
    %c9_i32 = arith.constant 9 : i32
    %102 = arith.index_cast %c9_i32 : i32 to index
    %103 = memref.load %arg1[%102] : memref<32xf32, #tpu.memory_space<smem>>
    %104 = vector.broadcast %103 : f32 to vector<1x128xf32>
    %105 = arith.mulf %0, %104 : vector<1x128xf32>
    %106 = arith.index_cast %c9_i32 : i32 to index
    %107 = memref.load %arg2[%106] : memref<32xf32, #tpu.memory_space<smem>>
    %108 = vector.broadcast %107 : f32 to vector<1x128xf32>
    %109 = arith.addf %105, %108 : vector<1x128xf32>
    %cst_10 = arith.constant 0.000000e+00 : f32
    %110 = vector.broadcast %cst_10 : f32 to vector<1x128xf32>
    %111 = arith.maximumf %109, %110 : vector<1x128xf32>
    %112 = arith.addf %101, %111 : vector<1x128xf32>
    %c10_i32 = arith.constant 10 : i32
    %113 = arith.index_cast %c10_i32 : i32 to index
    %114 = memref.load %arg1[%113] : memref<32xf32, #tpu.memory_space<smem>>
    %115 = vector.broadcast %114 : f32 to vector<1x128xf32>
    %116 = arith.mulf %0, %115 : vector<1x128xf32>
    %117 = arith.index_cast %c10_i32 : i32 to index
    %118 = memref.load %arg2[%117] : memref<32xf32, #tpu.memory_space<smem>>
    %119 = vector.broadcast %118 : f32 to vector<1x128xf32>
    %120 = arith.addf %116, %119 : vector<1x128xf32>
    %cst_11 = arith.constant 0.000000e+00 : f32
    %121 = vector.broadcast %cst_11 : f32 to vector<1x128xf32>
    %122 = arith.maximumf %120, %121 : vector<1x128xf32>
    %123 = arith.addf %112, %122 : vector<1x128xf32>
    %c11_i32 = arith.constant 11 : i32
    %124 = arith.index_cast %c11_i32 : i32 to index
    %125 = memref.load %arg1[%124] : memref<32xf32, #tpu.memory_space<smem>>
    %126 = vector.broadcast %125 : f32 to vector<1x128xf32>
    %127 = arith.mulf %0, %126 : vector<1x128xf32>
    %128 = arith.index_cast %c11_i32 : i32 to index
    %129 = memref.load %arg2[%128] : memref<32xf32, #tpu.memory_space<smem>>
    %130 = vector.broadcast %129 : f32 to vector<1x128xf32>
    %131 = arith.addf %127, %130 : vector<1x128xf32>
    %cst_12 = arith.constant 0.000000e+00 : f32
    %132 = vector.broadcast %cst_12 : f32 to vector<1x128xf32>
    %133 = arith.maximumf %131, %132 : vector<1x128xf32>
    %134 = arith.addf %123, %133 : vector<1x128xf32>
    %c12_i32 = arith.constant 12 : i32
    %135 = arith.index_cast %c12_i32 : i32 to index
    %136 = memref.load %arg1[%135] : memref<32xf32, #tpu.memory_space<smem>>
    %137 = vector.broadcast %136 : f32 to vector<1x128xf32>
    %138 = arith.mulf %0, %137 : vector<1x128xf32>
    %139 = arith.index_cast %c12_i32 : i32 to index
    %140 = memref.load %arg2[%139] : memref<32xf32, #tpu.memory_space<smem>>
    %141 = vector.broadcast %140 : f32 to vector<1x128xf32>
    %142 = arith.addf %138, %141 : vector<1x128xf32>
    %cst_13 = arith.constant 0.000000e+00 : f32
    %143 = vector.broadcast %cst_13 : f32 to vector<1x128xf32>
    %144 = arith.maximumf %142, %143 : vector<1x128xf32>
    %145 = arith.addf %134, %144 : vector<1x128xf32>
    %c13_i32 = arith.constant 13 : i32
    %c13_i32_14 = arith.constant 13 : i32
    %146 = arith.index_cast %c13_i32_14 : i32 to index
    %147 = memref.load %arg1[%146] : memref<32xf32, #tpu.memory_space<smem>>
    %148 = vector.broadcast %147 : f32 to vector<1x128xf32>
    %149 = arith.mulf %0, %148 : vector<1x128xf32>
    %150 = arith.index_cast %c13_i32_14 : i32 to index
    %151 = memref.load %arg2[%150] : memref<32xf32, #tpu.memory_space<smem>>
    %152 = vector.broadcast %151 : f32 to vector<1x128xf32>
    %153 = arith.addf %149, %152 : vector<1x128xf32>
    %cst_15 = arith.constant 0.000000e+00 : f32
    %154 = vector.broadcast %cst_15 : f32 to vector<1x128xf32>
    %155 = arith.maximumf %153, %154 : vector<1x128xf32>
    %156 = arith.subf %145, %155 : vector<1x128xf32>
    %c14_i32 = arith.constant 14 : i32
    %157 = arith.index_cast %c14_i32 : i32 to index
    %158 = memref.load %arg1[%157] : memref<32xf32, #tpu.memory_space<smem>>
    %159 = vector.broadcast %158 : f32 to vector<1x128xf32>
    %160 = arith.mulf %0, %159 : vector<1x128xf32>
    %161 = arith.index_cast %c14_i32 : i32 to index
    %162 = memref.load %arg2[%161] : memref<32xf32, #tpu.memory_space<smem>>
    %163 = vector.broadcast %162 : f32 to vector<1x128xf32>
    %164 = arith.addf %160, %163 : vector<1x128xf32>
    %cst_16 = arith.constant 0.000000e+00 : f32
    %165 = vector.broadcast %cst_16 : f32 to vector<1x128xf32>
    %166 = arith.maximumf %164, %165 : vector<1x128xf32>
    %167 = arith.subf %156, %166 : vector<1x128xf32>
    %c15_i32 = arith.constant 15 : i32
    %168 = arith.index_cast %c15_i32 : i32 to index
    %169 = memref.load %arg1[%168] : memref<32xf32, #tpu.memory_space<smem>>
    %170 = vector.broadcast %169 : f32 to vector<1x128xf32>
    %171 = arith.mulf %0, %170 : vector<1x128xf32>
    %172 = arith.index_cast %c15_i32 : i32 to index
    %173 = memref.load %arg2[%172] : memref<32xf32, #tpu.memory_space<smem>>
    %174 = vector.broadcast %173 : f32 to vector<1x128xf32>
    %175 = arith.addf %171, %174 : vector<1x128xf32>
    %cst_17 = arith.constant 0.000000e+00 : f32
    %176 = vector.broadcast %cst_17 : f32 to vector<1x128xf32>
    %177 = arith.maximumf %175, %176 : vector<1x128xf32>
    %178 = arith.subf %167, %177 : vector<1x128xf32>
    %c16_i32 = arith.constant 16 : i32
    %179 = arith.index_cast %c16_i32 : i32 to index
    %180 = memref.load %arg1[%179] : memref<32xf32, #tpu.memory_space<smem>>
    %181 = vector.broadcast %180 : f32 to vector<1x128xf32>
    %182 = arith.mulf %0, %181 : vector<1x128xf32>
    %183 = arith.index_cast %c16_i32 : i32 to index
    %184 = memref.load %arg2[%183] : memref<32xf32, #tpu.memory_space<smem>>
    %185 = vector.broadcast %184 : f32 to vector<1x128xf32>
    %186 = arith.addf %182, %185 : vector<1x128xf32>
    %cst_18 = arith.constant 0.000000e+00 : f32
    %187 = vector.broadcast %cst_18 : f32 to vector<1x128xf32>
    %188 = arith.maximumf %186, %187 : vector<1x128xf32>
    %189 = arith.subf %178, %188 : vector<1x128xf32>
    %c17_i32 = arith.constant 17 : i32
    %190 = arith.index_cast %c17_i32 : i32 to index
    %191 = memref.load %arg1[%190] : memref<32xf32, #tpu.memory_space<smem>>
    %192 = vector.broadcast %191 : f32 to vector<1x128xf32>
    %193 = arith.mulf %0, %192 : vector<1x128xf32>
    %194 = arith.index_cast %c17_i32 : i32 to index
    %195 = memref.load %arg2[%194] : memref<32xf32, #tpu.memory_space<smem>>
    %196 = vector.broadcast %195 : f32 to vector<1x128xf32>
    %197 = arith.addf %193, %196 : vector<1x128xf32>
    %cst_19 = arith.constant 0.000000e+00 : f32
    %198 = vector.broadcast %cst_19 : f32 to vector<1x128xf32>
    %199 = arith.maximumf %197, %198 : vector<1x128xf32>
    %200 = arith.subf %189, %199 : vector<1x128xf32>
    %c18_i32 = arith.constant 18 : i32
    %201 = arith.index_cast %c18_i32 : i32 to index
    %202 = memref.load %arg1[%201] : memref<32xf32, #tpu.memory_space<smem>>
    %203 = vector.broadcast %202 : f32 to vector<1x128xf32>
    %204 = arith.mulf %0, %203 : vector<1x128xf32>
    %205 = arith.index_cast %c18_i32 : i32 to index
    %206 = memref.load %arg2[%205] : memref<32xf32, #tpu.memory_space<smem>>
    %207 = vector.broadcast %206 : f32 to vector<1x128xf32>
    %208 = arith.addf %204, %207 : vector<1x128xf32>
    %cst_20 = arith.constant 0.000000e+00 : f32
    %209 = vector.broadcast %cst_20 : f32 to vector<1x128xf32>
    %210 = arith.maximumf %208, %209 : vector<1x128xf32>
    %211 = arith.subf %200, %210 : vector<1x128xf32>
    %c19_i32 = arith.constant 19 : i32
    %212 = arith.index_cast %c19_i32 : i32 to index
    %213 = memref.load %arg1[%212] : memref<32xf32, #tpu.memory_space<smem>>
    %214 = vector.broadcast %213 : f32 to vector<1x128xf32>
    %215 = arith.mulf %0, %214 : vector<1x128xf32>
    %216 = arith.index_cast %c19_i32 : i32 to index
    %217 = memref.load %arg2[%216] : memref<32xf32, #tpu.memory_space<smem>>
    %218 = vector.broadcast %217 : f32 to vector<1x128xf32>
    %219 = arith.addf %215, %218 : vector<1x128xf32>
    %cst_21 = arith.constant 0.000000e+00 : f32
    %220 = vector.broadcast %cst_21 : f32 to vector<1x128xf32>
    %221 = arith.maximumf %219, %220 : vector<1x128xf32>
    %222 = arith.subf %211, %221 : vector<1x128xf32>
    %c20_i32 = arith.constant 20 : i32
    %223 = arith.index_cast %c20_i32 : i32 to index
    %224 = memref.load %arg1[%223] : memref<32xf32, #tpu.memory_space<smem>>
    %225 = vector.broadcast %224 : f32 to vector<1x128xf32>
    %226 = arith.mulf %0, %225 : vector<1x128xf32>
    %227 = arith.index_cast %c20_i32 : i32 to index
    %228 = memref.load %arg2[%227] : memref<32xf32, #tpu.memory_space<smem>>
    %229 = vector.broadcast %228 : f32 to vector<1x128xf32>
    %230 = arith.addf %226, %229 : vector<1x128xf32>
    %cst_22 = arith.constant 0.000000e+00 : f32
    %231 = vector.broadcast %cst_22 : f32 to vector<1x128xf32>
    %232 = arith.maximumf %230, %231 : vector<1x128xf32>
    %233 = arith.subf %222, %232 : vector<1x128xf32>
    %c21_i32 = arith.constant 21 : i32
    %234 = arith.index_cast %c21_i32 : i32 to index
    %235 = memref.load %arg1[%234] : memref<32xf32, #tpu.memory_space<smem>>
    %236 = vector.broadcast %235 : f32 to vector<1x128xf32>
    %237 = arith.mulf %0, %236 : vector<1x128xf32>
    %238 = arith.index_cast %c21_i32 : i32 to index
    %239 = memref.load %arg2[%238] : memref<32xf32, #tpu.memory_space<smem>>
    %240 = vector.broadcast %239 : f32 to vector<1x128xf32>
    %241 = arith.addf %237, %240 : vector<1x128xf32>
    %cst_23 = arith.constant 0.000000e+00 : f32
    %242 = vector.broadcast %cst_23 : f32 to vector<1x128xf32>
    %243 = arith.maximumf %241, %242 : vector<1x128xf32>
    %244 = arith.subf %233, %243 : vector<1x128xf32>
    %c22_i32 = arith.constant 22 : i32
    %245 = arith.index_cast %c22_i32 : i32 to index
    %246 = memref.load %arg1[%245] : memref<32xf32, #tpu.memory_space<smem>>
    %247 = vector.broadcast %246 : f32 to vector<1x128xf32>
    %248 = arith.mulf %0, %247 : vector<1x128xf32>
    %249 = arith.index_cast %c22_i32 : i32 to index
    %250 = memref.load %arg2[%249] : memref<32xf32, #tpu.memory_space<smem>>
    %251 = vector.broadcast %250 : f32 to vector<1x128xf32>
    %252 = arith.addf %248, %251 : vector<1x128xf32>
    %cst_24 = arith.constant 0.000000e+00 : f32
    %253 = vector.broadcast %cst_24 : f32 to vector<1x128xf32>
    %254 = arith.maximumf %252, %253 : vector<1x128xf32>
    %255 = arith.subf %244, %254 : vector<1x128xf32>
    %c23_i32 = arith.constant 23 : i32
    %256 = arith.index_cast %c23_i32 : i32 to index
    %257 = memref.load %arg1[%256] : memref<32xf32, #tpu.memory_space<smem>>
    %258 = vector.broadcast %257 : f32 to vector<1x128xf32>
    %259 = arith.mulf %0, %258 : vector<1x128xf32>
    %260 = arith.index_cast %c23_i32 : i32 to index
    %261 = memref.load %arg2[%260] : memref<32xf32, #tpu.memory_space<smem>>
    %262 = vector.broadcast %261 : f32 to vector<1x128xf32>
    %263 = arith.addf %259, %262 : vector<1x128xf32>
    %cst_25 = arith.constant 0.000000e+00 : f32
    %264 = vector.broadcast %cst_25 : f32 to vector<1x128xf32>
    %265 = arith.maximumf %263, %264 : vector<1x128xf32>
    %266 = arith.subf %255, %265 : vector<1x128xf32>
    %c24_i32 = arith.constant 24 : i32
    %267 = arith.index_cast %c24_i32 : i32 to index
    %268 = memref.load %arg1[%267] : memref<32xf32, #tpu.memory_space<smem>>
    %269 = vector.broadcast %268 : f32 to vector<1x128xf32>
    %270 = arith.mulf %0, %269 : vector<1x128xf32>
    %271 = arith.index_cast %c24_i32 : i32 to index
    %272 = memref.load %arg2[%271] : memref<32xf32, #tpu.memory_space<smem>>
    %273 = vector.broadcast %272 : f32 to vector<1x128xf32>
    %274 = arith.addf %270, %273 : vector<1x128xf32>
    %cst_26 = arith.constant 0.000000e+00 : f32
    %275 = vector.broadcast %cst_26 : f32 to vector<1x128xf32>
    %276 = arith.maximumf %274, %275 : vector<1x128xf32>
    %277 = arith.subf %266, %276 : vector<1x128xf32>
    %c25_i32 = arith.constant 25 : i32
    %278 = arith.index_cast %c25_i32 : i32 to index
    %279 = memref.load %arg1[%278] : memref<32xf32, #tpu.memory_space<smem>>
    %280 = vector.broadcast %279 : f32 to vector<1x128xf32>
    %281 = arith.mulf %0, %280 : vector<1x128xf32>
    %282 = arith.index_cast %c25_i32 : i32 to index
    %283 = memref.load %arg2[%282] : memref<32xf32, #tpu.memory_space<smem>>
    %284 = vector.broadcast %283 : f32 to vector<1x128xf32>
    %285 = arith.addf %281, %284 : vector<1x128xf32>
    %cst_27 = arith.constant 0.000000e+00 : f32
    %286 = vector.broadcast %cst_27 : f32 to vector<1x128xf32>
    %287 = arith.maximumf %285, %286 : vector<1x128xf32>
    %288 = arith.subf %277, %287 : vector<1x128xf32>
    %c26_i32 = arith.constant 26 : i32
    %289 = arith.index_cast %c26_i32 : i32 to index
    %290 = memref.load %arg1[%289] : memref<32xf32, #tpu.memory_space<smem>>
    %291 = vector.broadcast %290 : f32 to vector<1x128xf32>
    %292 = arith.mulf %0, %291 : vector<1x128xf32>
    %293 = arith.index_cast %c26_i32 : i32 to index
    %294 = memref.load %arg2[%293] : memref<32xf32, #tpu.memory_space<smem>>
    %295 = vector.broadcast %294 : f32 to vector<1x128xf32>
    %296 = arith.addf %292, %295 : vector<1x128xf32>
    %cst_28 = arith.constant 0.000000e+00 : f32
    %297 = vector.broadcast %cst_28 : f32 to vector<1x128xf32>
    %298 = arith.maximumf %296, %297 : vector<1x128xf32>
    %299 = arith.subf %288, %298 : vector<1x128xf32>
    %c27_i32 = arith.constant 27 : i32
    %300 = arith.index_cast %c27_i32 : i32 to index
    %301 = memref.load %arg1[%300] : memref<32xf32, #tpu.memory_space<smem>>
    %302 = vector.broadcast %301 : f32 to vector<1x128xf32>
    %303 = arith.mulf %0, %302 : vector<1x128xf32>
    %304 = arith.index_cast %c27_i32 : i32 to index
    %305 = memref.load %arg2[%304] : memref<32xf32, #tpu.memory_space<smem>>
    %306 = vector.broadcast %305 : f32 to vector<1x128xf32>
    %307 = arith.addf %303, %306 : vector<1x128xf32>
    %cst_29 = arith.constant 0.000000e+00 : f32
    %308 = vector.broadcast %cst_29 : f32 to vector<1x128xf32>
    %309 = arith.maximumf %307, %308 : vector<1x128xf32>
    %310 = arith.subf %299, %309 : vector<1x128xf32>
    %c28_i32 = arith.constant 28 : i32
    %311 = arith.index_cast %c28_i32 : i32 to index
    %312 = memref.load %arg1[%311] : memref<32xf32, #tpu.memory_space<smem>>
    %313 = vector.broadcast %312 : f32 to vector<1x128xf32>
    %314 = arith.mulf %0, %313 : vector<1x128xf32>
    %315 = arith.index_cast %c28_i32 : i32 to index
    %316 = memref.load %arg2[%315] : memref<32xf32, #tpu.memory_space<smem>>
    %317 = vector.broadcast %316 : f32 to vector<1x128xf32>
    %318 = arith.addf %314, %317 : vector<1x128xf32>
    %cst_30 = arith.constant 0.000000e+00 : f32
    %319 = vector.broadcast %cst_30 : f32 to vector<1x128xf32>
    %320 = arith.maximumf %318, %319 : vector<1x128xf32>
    %321 = arith.subf %310, %320 : vector<1x128xf32>
    %c29_i32 = arith.constant 29 : i32
    %322 = arith.index_cast %c29_i32 : i32 to index
    %323 = memref.load %arg1[%322] : memref<32xf32, #tpu.memory_space<smem>>
    %324 = vector.broadcast %323 : f32 to vector<1x128xf32>
    %325 = arith.mulf %0, %324 : vector<1x128xf32>
    %326 = arith.index_cast %c29_i32 : i32 to index
    %327 = memref.load %arg2[%326] : memref<32xf32, #tpu.memory_space<smem>>
    %328 = vector.broadcast %327 : f32 to vector<1x128xf32>
    %329 = arith.addf %325, %328 : vector<1x128xf32>
    %cst_31 = arith.constant 0.000000e+00 : f32
    %330 = vector.broadcast %cst_31 : f32 to vector<1x128xf32>
    %331 = arith.maximumf %329, %330 : vector<1x128xf32>
    %332 = arith.subf %321, %331 : vector<1x128xf32>
    %c30_i32 = arith.constant 30 : i32
    %333 = arith.index_cast %c30_i32 : i32 to index
    %334 = memref.load %arg1[%333] : memref<32xf32, #tpu.memory_space<smem>>
    %335 = vector.broadcast %334 : f32 to vector<1x128xf32>
    %336 = arith.mulf %0, %335 : vector<1x128xf32>
    %337 = arith.index_cast %c30_i32 : i32 to index
    %338 = memref.load %arg2[%337] : memref<32xf32, #tpu.memory_space<smem>>
    %339 = vector.broadcast %338 : f32 to vector<1x128xf32>
    %340 = arith.addf %336, %339 : vector<1x128xf32>
    %cst_32 = arith.constant 0.000000e+00 : f32
    %341 = vector.broadcast %cst_32 : f32 to vector<1x128xf32>
    %342 = arith.maximumf %340, %341 : vector<1x128xf32>
    %343 = arith.subf %332, %342 : vector<1x128xf32>
    %c31_i32 = arith.constant 31 : i32
    %344 = arith.index_cast %c31_i32 : i32 to index
    %345 = memref.load %arg1[%344] : memref<32xf32, #tpu.memory_space<smem>>
    %346 = vector.broadcast %345 : f32 to vector<1x128xf32>
    %347 = arith.mulf %0, %346 : vector<1x128xf32>
    %348 = arith.index_cast %c31_i32 : i32 to index
    %349 = memref.load %arg2[%348] : memref<32xf32, #tpu.memory_space<smem>>
    %350 = vector.broadcast %349 : f32 to vector<1x128xf32>
    %351 = arith.addf %347, %350 : vector<1x128xf32>
    %cst_33 = arith.constant 0.000000e+00 : f32
    %352 = vector.broadcast %cst_33 : f32 to vector<1x128xf32>
    %353 = arith.maximumf %351, %352 : vector<1x128xf32>
    %354 = arith.subf %343, %353 : vector<1x128xf32>
    %c19_i32_34 = arith.constant 19 : i32
    %c0_35 = arith.constant 0 : index
    %c0_36 = arith.constant 0 : index
    %355 = vector.load %arg6[%c0_35, %c0_36] : memref<1x128xf32, #tpu.memory_space<vmem>>, vector<1x128xf32>
    tpu.vector_store %arg6[%c0_35, %c0_36], %354 {strides = array<i32>} : memref<1x128xf32, #tpu.memory_space<vmem>>, vector<1x128xf32>,
    return
  }
  func.func @transform_0(%arg0: i32) -> i32 {
    %c0_i32 = arith.constant 0 : i32
    %c0_i32_0 = arith.constant 0 : i32
    return %c0_i32 : i32
  }
  func.func @transform_1(%arg0: i32) -> i32 {
    %c0_i32 = arith.constant 0 : i32
    %c0_i32_0 = arith.constant 0 : i32
    return %c0_i32 : i32
  }
  func.func @transform_2(%arg0: i32) -> i32 {
    %c0_i32 = arith.constant 0 : i32
    %c0_i32_0 = arith.constant 0 : i32
    return %c0_i32 : i32
  }
  func.func @transform_3(%arg0: i32) -> i32 {
    %c0_i32 = arith.constant 0 : i32
    %c0_i32_0 = arith.constant 0 : i32
    return %c0_i32 : i32
  }
  func.func @transform_4(%arg0: i32) -> (i32, i32) {
    %c0_i32 = arith.constant 0 : i32
    %c0_i32_0 = arith.constant 0 : i32
    return %arg0, %c0_i32 : i32, i32
  }
  func.func @transform_5(%arg0: i32) -> (i32, i32) {
    %c0_i32 = arith.constant 0 : i32
    %c0_i32_0 = arith.constant 0 : i32
    return %arg0, %c0_i32 : i32, i32
  }
}

</mosaic_0001>

<llo_original>
// kernel: tpu_custom_call.1
$region0: #{tpu_custom_call.1}
  #allocation0 [shape = 'u32[]', space=smem, size = 0x4, offset = 0x4, fixed_abs, tag = 'smem constant byte address 0x4 - core index']
  #allocation1 [shape = 'u32[144,128]{1,0:T(1,128)}', space=vmem, size = 0x12000, scoped, tag = 'internal scratch']
  #allocation2 [shape = 'f32[1]{0:T(128)S(6)}', space=smem, size = 0x200, scoped, tag = 'scoped memory for tpu_custom_call.1']
  %s0 = inlined_call_operand.vmem [shape: f32[32], index: 0, kind: input, shape index: {}]
  %s1 = inlined_call_operand.vmem [shape: f32[32], index: 1, kind: input, shape index: {}]
  %s2 = inlined_call_operand.vmem [shape: f32[32], index: 2, kind: input, shape index: {}]
  %s3 = inlined_call_operand.<no memory space> [shape: f32[1], index: 3, kind: input, shape index: {}]
  %s4 = inlined_call_operand.vmem [shape: f32[1,128], index: 4, kind: input, shape index: {}]
  %s5 = inlined_call_operand.hbm [shape: f32[1,128], index: 5, kind: output, shape index: {}]
  %s6 = sld [smem:[#allocation0]]
  $region42: #{tpu_custom_call.1} parent=0
    _
  %s8 = ssub.s32 1, %s6
  %s9 = scalar_select 0, %s8, %s6
  %10 = sst [smem:[#allocation2]] %s3
  $region1: #{tpu_custom_call.1} parent=0
    #allocation3 [shape = 'u8[512]{0}', space=smem, size = 0x200, scoped, tag = 'input window, operand 0, single buffered']
    #allocation4 [shape = 's32[1]{0}', space=sflag, size = 0x4, scoped, tag = 'scoped memory for tpu_custom_call.1']
    #allocation5 [shape = 's32[1]{0}', space=sflag, size = 0x4, scoped, tag = 'scoped memory for tpu_custom_call.1']
    #allocation6 [shape = 'u8[512]{0}', space=smem, size = 0x200, scoped, tag = 'input window, operand 1, single buffered']
    #allocation7 [shape = 's32[1]{0}', space=sflag, size = 0x4, scoped, tag = 'scoped memory for tpu_custom_call.1']
    #allocation8 [shape = 'u8[512]{0}', space=smem, size = 0x200, scoped, tag = 'input window, operand 2, single buffered']
    #allocation9 [shape = 'u8[512]{0}', space=vmem, size = 0x400, scoped, tag = 'output window, operand 0, single buffered']
    %11 = vsyncpa [#allocation5], 0
    %12 = vsyncpa [#allocation7], 0
    %13 = vsyncpa [#allocation4], 0
    // Predicated region
    $region2: #{tpu_custom_call.1} parent=1 // pred_check
      _
    $region3: #{tpu_custom_call.1} parent=1 // pred_check_branch
      %15 = sbr.rel (0) target = $region5
    $region4: #{tpu_custom_call.1} parent=1 // pred_region
      %s17 = ssub.s32 16, 16
      %18 = vsyncadd [#allocation5], %s17
      %s20 = sshll.u32 %s0, 4
      %s21 = int_to_ptr.vmem [resolvable:$true] %s20
      %23 = dma.vmem_to_smem %s21, 16, [#allocation3], [#allocation5]
    $region5: #{tpu_custom_call.1} parent=1 // pred_fallthru
      _
    // Predicated region
    $region6: #{tpu_custom_call.1} parent=1 // pred_check
      _
    $region7: #{tpu_custom_call.1} parent=1 // pred_check_branch
      %25 = sbr.rel (0) target = $region9
    $region8: #{tpu_custom_call.1} parent=1 // pred_region
      %s27 = ssub.s32 16, 16
      %28 = vsyncadd [#allocation7], %s27
      %s30 = sshll.u32 %s1, 4
      %s31 = int_to_ptr.vmem [resolvable:$true] %s30
      %33 = dma.vmem_to_smem %s31, 16, [#allocation6], [#allocation7]
    $region9: #{tpu_custom_call.1} parent=1 // pred_fallthru
      _
    // Predicated region
    $region10: #{tpu_custom_call.1} parent=1 // pred_check
      _
    $region11: #{tpu_custom_call.1} parent=1 // pred_check_branch
      %35 = sbr.rel (0) target = $region13
    $region12: #{tpu_custom_call.1} parent=1 // pred_region
      %s37 = ssub.s32 16, 16
      %38 = vsyncadd [#allocation7], %s37
      %s40 = sshll.u32 %s2, 4
      %s41 = int_to_ptr.vmem [resolvable:$true] %s40
      %43 = dma.vmem_to_smem %s41, 16, [#allocation8], [#allocation7]
    $region13: #{tpu_custom_call.1} parent=1 // pred_fallthru
      _
    // Predicated region
    $region14: #{tpu_custom_call.1} parent=1 // pred_check
      _
    $region15: #{tpu_custom_call.1} parent=1 // pred_check_branch
      %45 = sbr.rel (0) target = $region17
    $region16: #{tpu_custom_call.1} parent=1 // pred_region
      _
    $region17: #{tpu_custom_call.1} parent=1 // pred_fallthru
      _
    // Predicated region
    $region18: #{tpu_custom_call.1} parent=1 // pred_check
      _
    $region19: #{tpu_custom_call.1} parent=1 // pred_check_branch
      %47 = sbr.rel (0) target = $region21
    $region20: #{tpu_custom_call.1} parent=1 // pred_region
      _
    $region21: #{tpu_custom_call.1} parent=1 // pred_fallthru
      _
    // Predicated region
    $region22: #{tpu_custom_call.1} parent=1 // pred_check
      _
    $region23: #{tpu_custom_call.1} parent=1 // pred_check_branch
      %49 = sbr.rel (0) target = $region25
    $region24: #{tpu_custom_call.1} parent=1 // pred_region
      %50 = dma.done [#allocation5], 16
    $region25: #{tpu_custom_call.1} parent=1 // pred_fallthru
      _
    // Predicated region
    $region26: #{tpu_custom_call.1} parent=1 // pred_check
      _
    $region27: #{tpu_custom_call.1} parent=1 // pred_check_branch
      %52 = sbr.rel (0) target = $region29
    $region28: #{tpu_custom_call.1} parent=1 // pred_region
      %53 = dma.done [#allocation7], 16
    $region29: #{tpu_custom_call.1} parent=1 // pred_fallthru
      _
    // Predicated region
    $region30: #{tpu_custom_call.1} parent=1 // pred_check
      _
    $region31: #{tpu_custom_call.1} parent=1 // pred_check_branch
      %55 = sbr.rel (0) target = $region33
    $region32: #{tpu_custom_call.1} parent=1 // pred_region
      %56 = dma.done [#allocation7], 16
    $region33: #{tpu_custom_call.1} parent=1 // pred_fallthru
      _
    %57 = sfence
    %v58 = vld [vmem:[%s4] sm:$0x1]
    %s59 = sld [smem:[#allocation2]]
    %v60 = vstv %s59
    %s61 = sld [smem:[#allocation3]]
    %v62 = vstv %s61
    %v63 = vmul.f32 %v58, %v62
    %s64 = sld [smem:[#allocation6]]
    %v65 = vstv %s64
    %v66 = vadd.f32 %v63, %v65
    %v67 = vmax.f32 %v66, 0.0
    %v68 = vadd.f32 %v60, %v67
    %s69 = sld [smem:[#allocation3 + $0x1]]
    %v70 = vstv %s69
    %v71 = vmul.f32 %v58, %v70
    %s72 = sld [smem:[#allocation6 + $0x1]]
    %v73 = vstv %s72
    %v74 = vadd.f32 %v71, %v73
    %v75 = vmax.f32 %v74, 0.0
    %v76 = vadd.f32 %v68, %v75
    %s77 = sld [smem:[#allocation3 + $0x2]]
    %v78 = vstv %s77
    %v79 = vmul.f32 %v58, %v78
    %s80 = sld [smem:[#allocation6 + $0x2]]
    %v81 = vstv %s80
    %v82 = vadd.f32 %v79, %v81
    %v83 = vmax.f32 %v82, 0.0
    %v84 = vadd.f32 %v76, %v83
    %s85 = sld [smem:[#allocation3 + $0x3]]
    %v86 = vstv %s85
    %v87 = vmul.f32 %v58, %v86
    %s88 = sld [smem:[#allocation6 + $0x3]]
    %v89 = vstv %s88
    %v90 = vadd.f32 %v87, %v89
    %v91 = vmax.f32 %v90, 0.0
    %v92 = vadd.f32 %v84, %v91
    %s93 = sld [smem:[#allocation3 + $0x4]]
    %v94 = vstv %s93
    %v95 = vmul.f32 %v58, %v94
    %s96 = sld [smem:[#allocation6 + $0x4]]
    %v97 = vstv %s96
    %v98 = vadd.f32 %v95, %v97
    %v99 = vmax.f32 %v98, 0.0
    %v100 = vadd.f32 %v92, %v99
    %s101 = sld [smem:[#allocation3 + $0x5]]
    %v102 = vstv %s101
    %v103 = vmul.f32 %v58, %v102
    %s104 = sld [smem:[#allocation6 + $0x5]]
    %v105 = vstv %s104
    %v106 = vadd.f32 %v103, %v105
    %v107 = vmax.f32 %v106, 0.0
    %v108 = vadd.f32 %v100, %v107
    %s109 = sld [smem:[#allocation3 + $0x6]]
    %v110 = vstv %s109
    %v111 = vmul.f32 %v58, %v110
    %s112 = sld [smem:[#allocation6 + $0x6]]
    %v113 = vstv %s112
    %v114 = vadd.f32 %v111, %v113
    %v115 = vmax.f32 %v114, 0.0
    %v116 = vadd.f32 %v108, %v115
    %s117 = sld [smem:[#allocation3 + $0x7]]
    %v118 = vstv %s117
    %v119 = vmul.f32 %v58, %v118
    %s120 = sld [smem:[#allocation6 + $0x7]]
    %v121 = vstv %s120
    %v122 = vadd.f32 %v119, %v121
    %v123 = vmax.f32 %v122, 0.0
    %v124 = vadd.f32 %v116, %v123
    %s125 = sld [smem:[#allocation3 + $0x8]]
    %v126 = vstv %s125
    %v127 = vmul.f32 %v58, %v126
    %s128 = sld [smem:[#allocation6 + $0x8]]
    %v129 = vstv %s128
    %v130 = vadd.f32 %v127, %v129
    %v131 = vmax.f32 %v130, 0.0
    %v132 = vadd.f32 %v124, %v131
    %s133 = sld [smem:[#allocation3 + $0x9]]
    %v134 = vstv %s133
    %v135 = vmul.f32 %v58, %v134
    %s136 = sld [smem:[#allocation6 + $0x9]]
    %v137 = vstv %s136
    %v138 = vadd.f32 %v135, %v137
    %v139 = vmax.f32 %v138, 0.0
    %v140 = vadd.f32 %v132, %v139
    %s141 = sld [smem:[#allocation3 + $0xa]]
    %v142 = vstv %s141
    %v143 = vmul.f32 %v58, %v142
    %s144 = sld [smem:[#allocation6 + $0xa]]
    %v145 = vstv %s144
    %v146 = vadd.f32 %v143, %v145
    %v147 = vmax.f32 %v146, 0.0
    %v148 = vadd.f32 %v140, %v147
    %s149 = sld [smem:[#allocation3 + $0xb]]
    %v150 = vstv %s149
    %v151 = vmul.f32 %v58, %v150
    %s152 = sld [smem:[#allocation6 + $0xb]]
    %v153 = vstv %s152
    %v154 = vadd.f32 %v151, %v153
    %v155 = vmax.f32 %v154, 0.0
    %v156 = vadd.f32 %v148, %v155
    %s157 = sld [smem:[#allocation3 + $0xc]]
    %v158 = vstv %s157
    %v159 = vmul.f32 %v58, %v158
    %s160 = sld [smem:[#allocation6 + $0xc]]
    %v161 = vstv %s160
    %v162 = vadd.f32 %v159, %v161
    %v163 = vmax.f32 %v162, 0.0
    %v164 = vadd.f32 %v156, %v163
    %s165 = sld [smem:[#allocation3 + $0xd]]
    %v166 = vstv %s165
    %v167 = vmul.f32 %v58, %v166
    %s168 = sld [smem:[#allocation6 + $0xd]]
    %v169 = vstv %s168
    %v170 = vadd.f32 %v167, %v169
    %v171 = vmax.f32 %v170, 0.0
    %v172 = vsub.f32 %v164, %v171
    %s173 = sld [smem:[#allocation3 + $0xe]]
    %v174 = vstv %s173
    %v175 = vmul.f32 %v58, %v174
    %s176 = sld [smem:[#allocation6 + $0xe]]
    %v177 = vstv %s176
    %v178 = vadd.f32 %v175, %v177
    %v179 = vmax.f32 %v178, 0.0
    %v180 = vsub.f32 %v172, %v179
    %s181 = sld [smem:[#allocation3 + $0xf]]
    %v182 = vstv %s181
    %v183 = vmul.f32 %v58, %v182
    %s184 = sld [smem:[#allocation6 + $0xf]]
    %v185 = vstv %s184
    %v186 = vadd.f32 %v183, %v185
    %v187 = vmax.f32 %v186, 0.0
    %v188 = vsub.f32 %v180, %v187
    %s189 = sld [smem:[#allocation3 + $0x10]]
    %v190 = vstv %s189
    %v191 = vmul.f32 %v58, %v190
    %s192 = sld [smem:[#allocation6 + $0x10]]
    %v193 = vstv %s192
    %v194 = vadd.f32 %v191, %v193
    %v195 = vmax.f32 %v194, 0.0
    %v196 = vsub.f32 %v188, %v195
    %s197 = sld [smem:[#allocation3 + $0x11]]
    %v198 = vstv %s197
    %v199 = vmul.f32 %v58, %v198
    %s200 = sld [smem:[#allocation6 + $0x11]]
    %v201 = vstv %s200
    %v202 = vadd.f32 %v199, %v201
    %v203 = vmax.f32 %v202, 0.0
    %v204 = vsub.f32 %v196, %v203
    %s205 = sld [smem:[#allocation3 + $0x12]]
    %v206 = vstv %s205
    %v207 = vmul.f32 %v58, %v206
    %s208 = sld [smem:[#allocation6 + $0x12]]
    %v209 = vstv %s208
    %v210 = vadd.f32 %v207, %v209
    %v211 = vmax.f32 %v210, 0.0
    %v212 = vsub.f32 %v204, %v211
    %s213 = sld [smem:[#allocation3 + $0x13]]
    %v214 = vstv %s213
    %v215 = vmul.f32 %v58, %v214
    %s216 = sld [smem:[#allocation6 + $0x13]]
    %v217 = vstv %s216
    %v218 = vadd.f32 %v215, %v217
    %v219 = vmax.f32 %v218, 0.0
    %v220 = vsub.f32 %v212, %v219
    %s221 = sld [smem:[#allocation3 + $0x14]]
    %v222 = vstv %s221
    %v223 = vmul.f32 %v58, %v222
    %s224 = sld [smem:[#allocation6 + $0x14]]
    %v225 = vstv %s224
    %v226 = vadd.f32 %v223, %v225
    %v227 = vmax.f32 %v226, 0.0
    %v228 = vsub.f32 %v220, %v227
    %s229 = sld [smem:[#allocation3 + $0x15]]
    %v230 = vstv %s229
    %v231 = vmul.f32 %v58, %v230
    %s232 = sld [smem:[#allocation6 + $0x15]]
    %v233 = vstv %s232
    %v234 = vadd.f32 %v231, %v233
    %v235 = vmax.f32 %v234, 0.0
    %v236 = vsub.f32 %v228, %v235
    %s237 = sld [smem:[#allocation3 + $0x16]]
    %v238 = vstv %s237
    %v239 = vmul.f32 %v58, %v238
    %s240 = sld [smem:[#allocation6 + $0x16]]
    %v241 = vstv %s240
    %v242 = vadd.f32 %v239, %v241
    %v243 = vmax.f32 %v242, 0.0
    %v244 = vsub.f32 %v236, %v243
    %s245 = sld [smem:[#allocation3 + $0x17]]
    %v246 = vstv %s245
    %v247 = vmul.f32 %v58, %v246
    %s248 = sld [smem:[#allocation6 + $0x17]]
    %v249 = vstv %s248
    %v250 = vadd.f32 %v247, %v249
    %v251 = vmax.f32 %v250, 0.0
    %v252 = vsub.f32 %v244, %v251
    %s253 = sld [smem:[#allocation3 + $0x18]]
    %v254 = vstv %s253
    %v255 = vmul.f32 %v58, %v254
    %s256 = sld [smem:[#allocation6 + $0x18]]
    %v257 = vstv %s256
    %v258 = vadd.f32 %v255, %v257
    %v259 = vmax.f32 %v258, 0.0
    %v260 = vsub.f32 %v252, %v259
    %s261 = sld [smem:[#allocation3 + $0x19]]
    %v262 = vstv %s261
    %v263 = vmul.f32 %v58, %v262
    %s264 = sld [smem:[#allocation6 + $0x19]]
    %v265 = vstv %s264
    %v266 = vadd.f32 %v263, %v265
    %v267 = vmax.f32 %v266, 0.0
    %v268 = vsub.f32 %v260, %v267
    %s269 = sld [smem:[#allocation3 + $0x1a]]
    %v270 = vstv %s269
    %v271 = vmul.f32 %v58, %v270
    %s272 = sld [smem:[#allocation6 + $0x1a]]
    %v273 = vstv %s272
    %v274 = vadd.f32 %v271, %v273
    %v275 = vmax.f32 %v274, 0.0
    %v276 = vsub.f32 %v268, %v275
    %s277 = sld [smem:[#allocation3 + $0x1b]]
    %v278 = vstv %s277
    %v279 = vmul.f32 %v58, %v278
    %s280 = sld [smem:[#allocation6 + $0x1b]]
    %v281 = vstv %s280
    %v282 = vadd.f32 %v279, %v281
    %v283 = vmax.f32 %v282, 0.0
    %v284 = vsub.f32 %v276, %v283
    %s285 = sld [smem:[#allocation3 + $0x1c]]
    %v286 = vstv %s285
    %v287 = vmul.f32 %v58, %v286
    %s288 = sld [smem:[#allocation6 + $0x1c]]
    %v289 = vstv %s288
    %v290 = vadd.f32 %v287, %v289
    %v291 = vmax.f32 %v290, 0.0
    %v292 = vsub.f32 %v284, %v291
    %s293 = sld [smem:[#allocation3 + $0x1d]]
    %v294 = vstv %s293
    %v295 = vmul.f32 %v58, %v294
    %s296 = sld [smem:[#allocation6 + $0x1d]]
    %v297 = vstv %s296
    %v298 = vadd.f32 %v295, %v297
    %v299 = vmax.f32 %v298, 0.0
    %v300 = vsub.f32 %v292, %v299
    %s301 = sld [smem:[#allocation3 + $0x1e]]
    %v302 = vstv %s301
    %v303 = vmul.f32 %v58, %v302
    %s304 = sld [smem:[#allocation6 + $0x1e]]
    %v305 = vstv %s304
    %v306 = vadd.f32 %v303, %v305
    %v307 = vmax.f32 %v306, 0.0
    %v308 = vsub.f32 %v300, %v307
    %s309 = sld [smem:[#allocation3 + $0x1f]]
    %v310 = vstv %s309
    %v311 = vmul.f32 %v58, %v310
    %s312 = sld [smem:[#allocation6 + $0x1f]]
    %v313 = vstv %s312
    %v314 = vadd.f32 %v311, %v313
    %v315 = vmax.f32 %v314, 0.0
    %v316 = vsub.f32 %v308, %v315
    %317 = vst [vmem:[#allocation9] sm:$0x1] %v316
    // Predicated region
    $region34: #{tpu_custom_call.1} parent=1 // pred_check
      _
    $region35: #{tpu_custom_call.1} parent=1 // pred_check_branch
      %319 = sbr.rel (0) target = $region37
    $region36: #{tpu_custom_call.1} parent=1 // pred_region
      %s321 = ssub.s32 16, 16
      %322 = vsyncadd [#allocation4], %s321
      %s324 = sshll.u32 [#allocation9], 4
      %s325 = int_to_ptr.vmem [resolvable:$true] %s324
      %327 = dma.vmem_to_hbm [thread:$0]  %s325, 16, %s5, [#allocation4]
    $region37: #{tpu_custom_call.1} parent=1 // pred_fallthru
      _
    // Predicated region
    $region38: #{tpu_custom_call.1} parent=1 // pred_check
      _
    $region39: #{tpu_custom_call.1} parent=1 // pred_check_branch
      %329 = sbr.rel (0) target = $region41
    $region40: #{tpu_custom_call.1} parent=1 // pred_region
      %330 = dma.done [#allocation4], 16
    $region41: #{tpu_custom_call.1} parent=1 // pred_fallthru
      _
    %331 = vsyncpa [#allocation4], 1
    %332 = vsyncpa [#allocation5], 1
    %333 = vsyncpa [#allocation7], 1

</llo_original>
